<compile_context>
chip_gen: v7x
topology: tpu7x:2x2x1
jax: 0.10.0
libtpu: 0.0.40
codegen_flags: <defaults>
</compile_context>

<pallas_src>
import functools

import jax
import jax.numpy as jnp
from jax.experimental import pallas as pl
from jax.experimental.pallas import tpu as pltpu

_GUARD = 8  # sentinel guard rows above/below the channel-flattened image slab


def _hmin3(v, wp):
    """1x3 horizontal min via lane rolls (wrap lands in sentinel pad columns)."""
    left = pltpu.roll(v, shift=1, axis=1)         # v[i-1]
    right = pltpu.roll(v, shift=wp - 1, axis=1)   # v[i+1]
    return jnp.minimum(jnp.minimum(left, v), right)


def _hmax5(v, wp):
    """1x5 horizontal max (fused dilate3∘dilate3): 3-roll doubling scheme."""
    a = jnp.maximum(v, pltpu.roll(v, shift=wp - 1, axis=1))     # max(v[i], v[i+1])
    b = jnp.maximum(a, pltpu.roll(a, shift=2, axis=1))          # max(v[i-2..i+1])
    return jnp.maximum(b, pltpu.roll(v, shift=wp - 2, axis=1))  # ... + v[i+2]


def _vmin3(buf_ref, rows):
    """3x1 vertical min via sublane-shifted window loads (vld slot, not XLU)."""
    out = buf_ref[pl.ds(_GUARD - 1, rows), :]
    for off in (0, 1):
        out = jnp.minimum(out, buf_ref[pl.ds(_GUARD + off, rows), :])
    return out


def _vmax5(buf_ref, rows):
    """5x1 vertical max via sublane-shifted window loads."""
    out = buf_ref[pl.ds(_GUARD - 2, rows), :]
    for off in (-1, 0, 1, 2):
        out = jnp.maximum(out, buf_ref[pl.ds(_GUARD + off, rows), :])
    return out


def _opening_closing_kernel(x_ref, o_ref, buf_ref, *, h, w, hp, wp):
    cb = x_ref.shape[0]          # channels in this block
    rows = cb * hp               # channel-flattened image slab rows
    g = _GUARD
    pinf = jnp.float32(jnp.inf)
    ninf = jnp.float32(-jnp.inf)
    f32 = jnp.float32

    # Hoisted pad mask over the (rows, wp) slab window (True outside the image).
    ri = jax.lax.broadcasted_iota(jnp.int32, (rows, wp), 0)
    ci = jax.lax.broadcasted_iota(jnp.int32, (rows, wp), 1)
    row_ok = ri < 0
    for cc in range(cb):
        row_ok = row_ok | ((ri >= cc * hp) & (ri < cc * hp + h))
    pad_mask = jnp.logical_not(row_ok & (ci < w))

    # Stage the image into the sentinel-padded slab (erosion sentinel = +inf).
    # Each channel occupies rows [g + c*hp, g + c*hp + h); >=2 sentinel pad rows
    # follow every channel and >=2 sentinel pad columns follow every image row,
    # so circular lane rolls / shifted sublane loads always land on sentinel.
    buf_ref[...] = jnp.full(buf_ref.shape, pinf, dtype=f32)
    for cc in range(cb):
        buf_ref[pl.ds(g + cc * hp, h), pl.ds(0, w)] = x_ref[cc]

    # closing(opening(x)) = erode3(dilate3(dilate3(erode3(x))))
    #                     = erode3(dilate5(erode3(x)))   (geodesic, rect domain)

    # ---- pass 1: 3x3 erosion ------------------------------------------------
    v = buf_ref[pl.ds(g, rows), :]
    buf_ref[pl.ds(g, rows), :] = _hmin3(v, wp)
    e1 = _vmin3(buf_ref, rows)

    # ---- pass 2: fused 5x5 dilation ------------------------------------------
    buf_ref[pl.ds(0, g), :] = jnp.full((g, wp), ninf, dtype=f32)
    buf_ref[pl.ds(g + rows, g), :] = jnp.full((g, wp), ninf, dtype=f32)
    buf_ref[pl.ds(g, rows), :] = _hmax5(jnp.where(pad_mask, ninf, e1), wp)
    d1 = _vmax5(buf_ref, rows)

    # ---- pass 3: 3x3 erosion --------------------------------------------------
    buf_ref[pl.ds(0, g), :] = jnp.full((g, wp), pinf, dtype=f32)
    buf_ref[pl.ds(g + rows, g), :] = jnp.full((g, wp), pinf, dtype=f32)
    buf_ref[pl.ds(g, rows), :] = _hmin3(jnp.where(pad_mask, pinf, d1), wp)
    e2 = _vmin3(buf_ref, rows)

    # ---- unpadded output store (no wrapper slice, no pad-lane HBM traffic) ----
    for cc in range(cb):
        o_ref[cc] = e2[cc * hp:cc * hp + h, :w]


def opening_and_closing(x):
    """x: (C, H, W) float32 -> (C, H, W) float32."""
    x = x.astype(jnp.float32)
    c, h, w = x.shape
    # >=2 sentinel pad rows / columns per channel plane (needed by the fused
    # 5-wide pass and the circular-roll wrap argument), rounded to (8, 128).
    hp = pl.cdiv(h + 2, 8) * 8
    wp = pl.cdiv(w + 2, 128) * 128

    # Channel block: largest divisor of C (capped) whose footprint fits VMEM.
    def footprint(cb):
        io = 2 * 2 * cb * h * w * 4                      # in+out, double-buffered
        scratch = (cb * hp + 2 * _GUARD) * wp * 4        # sentinel slab
        return io + scratch

    c_blk = min(c, 8)
    while c_blk > 1 and (footprint(c_blk) > (12 << 20) or c % c_blk):
        c_blk -= 1

    kernel = functools.partial(_opening_closing_kernel, h=h, w=w, hp=hp, wp=wp)
    return pl.pallas_call(
        kernel,
        out_shape=jax.ShapeDtypeStruct((c, h, w), jnp.float32),
        grid=(c // c_blk,),
        in_specs=[pl.BlockSpec((c_blk, h, w), lambda i: (i, 0, 0))],
        out_specs=pl.BlockSpec((c_blk, h, w), lambda i: (i, 0, 0)),
        scratch_shapes=[pltpu.VMEM((c_blk * hp + 2 * _GUARD, wp), jnp.float32)],
        compiler_params=pltpu.CompilerParams(
            dimension_semantics=("parallel",),
            vmem_limit_bytes=48 << 20),
    )(x)


def _reference(x):
    """Pure-JAX reference: flat 3x3 opening then closing via reduce_window."""
    x = x.astype(jnp.float32)

    def erode(a):
        return jax.lax.reduce_window(
            a, jnp.inf, jax.lax.min, (1, 3, 3), (1, 1, 1), "SAME")

    def dilate(a):
        return jax.lax.reduce_window(
            a, -jnp.inf, jax.lax.max, (1, 3, 3), (1, 1, 1), "SAME")

    opened = dilate(erode(x))
    return erode(dilate(opened))


if __name__ == "__main__":
    key = jax.random.PRNGKey(0)
    # Unbatched image-like input (C, H, W), as implied by the module's
    # unsqueeze(0)/squeeze() around an NCHW morphology pipeline.
    x = jax.random.uniform(key, (3, 16, 16), dtype=jnp.float32)

    out = jax.block_until_ready(opening_and_closing(x))

    ref = _reference(x)
    assert out.shape == (3, 16, 16)
    assert jnp.allclose(out, ref, atol=1e-6), "mismatch vs reference"
    print("KERNEL_OK")
</pallas_src>

<mosaic_0001>
module attributes {stable_mosaic.version = 11 : i64} {
  func.func @_opening_closing_kernel(%arg0: i32, %arg1: memref<3x16x16xf32, #tpu.memory_space<vmem>>, %arg2: memref<3x16x16xf32, #tpu.memory_space<vmem>>, %arg3: memref<88x128xf32, #tpu.memory_space<vmem>>) attributes {dimension_semantics = [#tpu.dimension_semantics<parallel>], iteration_bounds = array<i64: 1>, scalar_prefetch = 0 : i64, scratch_operands = 1 : i64, tpu.core_type = #tpu.core_type<tc>, window_params = [{transform_indices = @transform_0, window_bounds = array<i64: 3, 16, 16>}, {transform_indices = @transform_1, window_bounds = array<i64: 3, 16, 16>}]} {
    %0 = tpu.iota {dimensions = array<i32: 0>} : vector<72x128xi32>
    %1 = tpu.iota {dimensions = array<i32: 1>} : vector<72x128xi32>
    %c0_i32 = arith.constant 0 : i32
    %2 = vector.broadcast %c0_i32 : i32 to vector<72x128xi32>
    %3 = arith.cmpi slt, %0, %2 : vector<72x128xi32>
    %c0_i32_0 = arith.constant 0 : i32
    %4 = vector.broadcast %c0_i32_0 : i32 to vector<72x128xi32>
    %5 = arith.cmpi sge, %0, %4 : vector<72x128xi32>
    %c16_i32 = arith.constant 16 : i32
    %6 = vector.broadcast %c16_i32 : i32 to vector<72x128xi32>
    %7 = arith.cmpi slt, %0, %6 : vector<72x128xi32>
    %8 = arith.andi %5, %7 : vector<72x128xi1>
    %9 = arith.ori %3, %8 : vector<72x128xi1>
    %c24_i32 = arith.constant 24 : i32
    %10 = vector.broadcast %c24_i32 : i32 to vector<72x128xi32>
    %11 = arith.cmpi sge, %0, %10 : vector<72x128xi32>
    %c40_i32 = arith.constant 40 : i32
    %12 = vector.broadcast %c40_i32 : i32 to vector<72x128xi32>
    %13 = arith.cmpi slt, %0, %12 : vector<72x128xi32>
    %14 = arith.andi %11, %13 : vector<72x128xi1>
    %15 = arith.ori %9, %14 : vector<72x128xi1>
    %c48_i32 = arith.constant 48 : i32
    %16 = vector.broadcast %c48_i32 : i32 to vector<72x128xi32>
    %17 = arith.cmpi sge, %0, %16 : vector<72x128xi32>
    %c64_i32 = arith.constant 64 : i32
    %18 = vector.broadcast %c64_i32 : i32 to vector<72x128xi32>
    %19 = arith.cmpi slt, %0, %18 : vector<72x128xi32>
    %20 = arith.andi %17, %19 : vector<72x128xi1>
    %21 = arith.ori %15, %20 : vector<72x128xi1>
    %c16_i32_1 = arith.constant 16 : i32
    %22 = vector.broadcast %c16_i32_1 : i32 to vector<72x128xi32>
    %23 = arith.cmpi slt, %1, %22 : vector<72x128xi32>
    %24 = arith.andi %21, %23 : vector<72x128xi1>
    %cst = arith.constant dense<true> : vector<72x128xi1>
    %25 = arith.xori %24, %cst : vector<72x128xi1>
    %cst_2 = arith.constant 0x7F800000 : f32
    %26 = vector.broadcast %cst_2 : f32 to vector<88x128xf32>
    %c0 = arith.constant 0 : index
    %c0_3 = arith.constant 0 : index
    %27 = vector.load %arg3[%c0, %c0_3] : memref<88x128xf32, #tpu.memory_space<vmem>>, vector<88x128xf32>
    tpu.vector_store %arg3[%c0, %c0_3], %26 {strides = array<i32>} : memref<88x128xf32, #tpu.memory_space<vmem>>, vector<88x128xf32>,
    %c0_4 = arith.constant 0 : index
    %c0_5 = arith.constant 0 : index
    %c0_6 = arith.constant 0 : index
    %28 = vector.load %arg1[%c0_4, %c0_5, %c0_6] : memref<3x16x16xf32, #tpu.memory_space<vmem>>, vector<1x16x16xf32>
    %29 = vector.shape_cast %28 : vector<1x16x16xf32> to vector<16x16xf32>
    %c8 = arith.constant 8 : index
    %c0_7 = arith.constant 0 : index
    %30 = vector.load %arg3[%c8, %c0_7] : memref<88x128xf32, #tpu.memory_space<vmem>>, vector<16x16xf32>
    tpu.vector_store %arg3[%c8, %c0_7], %29 {strides = array<i32>} : memref<88x128xf32, #tpu.memory_space<vmem>>, vector<16x16xf32>,
    %c1 = arith.constant 1 : index
    %c0_8 = arith.constant 0 : index
    %c0_9 = arith.constant 0 : index
    %31 = vector.load %arg1[%c1, %c0_8, %c0_9] : memref<3x16x16xf32, #tpu.memory_space<vmem>>, vector<1x16x16xf32>
    %32 = vector.shape_cast %31 : vector<1x16x16xf32> to vector<16x16xf32>
    %c32 = arith.constant 32 : index
    %c0_10 = arith.constant 0 : index
    %33 = vector.load %arg3[%c32, %c0_10] : memref<88x128xf32, #tpu.memory_space<vmem>>, vector<16x16xf32>
    tpu.vector_store %arg3[%c32, %c0_10], %32 {strides = array<i32>} : memref<88x128xf32, #tpu.memory_space<vmem>>, vector<16x16xf32>,
    %c2 = arith.constant 2 : index
    %c0_11 = arith.constant 0 : index
    %c0_12 = arith.constant 0 : index
    %34 = vector.load %arg1[%c2, %c0_11, %c0_12] : memref<3x16x16xf32, #tpu.memory_space<vmem>>, vector<1x16x16xf32>
    %35 = vector.shape_cast %34 : vector<1x16x16xf32> to vector<16x16xf32>
    %c56 = arith.constant 56 : index
    %c0_13 = arith.constant 0 : index
    %36 = vector.load %arg3[%c56, %c0_13] : memref<88x128xf32, #tpu.memory_space<vmem>>, vector<16x16xf32>
    tpu.vector_store %arg3[%c56, %c0_13], %35 {strides = array<i32>} : memref<88x128xf32, #tpu.memory_space<vmem>>, vector<16x16xf32>,
    %c8_14 = arith.constant 8 : index
    %c0_15 = arith.constant 0 : index
    %37 = vector.load %arg3[%c8_14, %c0_15] : memref<88x128xf32, #tpu.memory_space<vmem>>, vector<72x128xf32>
    %c1_i32 = arith.constant 1 : i32
    %38 = tpu.dynamic_rotate %37 by %c1_i32 dim 1 : vector<72x128xf32>, i32 -> vector<72x128xf32>
    %c127_i32 = arith.constant 127 : i32
    %39 = tpu.dynamic_rotate %37 by %c127_i32 dim 1 : vector<72x128xf32>, i32 -> vector<72x128xf32>
    %40 = arith.minimumf %38, %37 : vector<72x128xf32>
    %41 = arith.minimumf %40, %39 : vector<72x128xf32>
    %c8_16 = arith.constant 8 : index
    %c0_17 = arith.constant 0 : index
    %42 = vector.load %arg3[%c8_16, %c0_17] : memref<88x128xf32, #tpu.memory_space<vmem>>, vector<72x128xf32>
    tpu.vector_store %arg3[%c8_16, %c0_17], %41 {strides = array<i32>} : memref<88x128xf32, #tpu.memory_space<vmem>>, vector<72x128xf32>,
    %c7 = arith.constant 7 : index
    %c0_18 = arith.constant 0 : index
    %43 = vector.load %arg3[%c7, %c0_18] : memref<88x128xf32, #tpu.memory_space<vmem>>, vector<72x128xf32>
    %c8_19 = arith.constant 8 : index
    %c0_20 = arith.constant 0 : index
    %44 = vector.load %arg3[%c8_19, %c0_20] : memref<88x128xf32, #tpu.memory_space<vmem>>, vector<72x128xf32>
    %45 = arith.minimumf %43, %44 : vector<72x128xf32>
    %c9 = arith.constant 9 : index
    %c0_21 = arith.constant 0 : index
    %46 = vector.load %arg3[%c9, %c0_21] : memref<88x128xf32, #tpu.memory_space<vmem>>, vector<72x128xf32>
    %47 = arith.minimumf %45, %46 : vector<72x128xf32>
    %cst_22 = arith.constant 0xFF800000 : f32
    %48 = vector.broadcast %cst_22 : f32 to vector<8x128xf32>
    %c0_23 = arith.constant 0 : index
    %c0_24 = arith.constant 0 : index
    %49 = vector.load %arg3[%c0_23, %c0_24] : memref<88x128xf32, #tpu.memory_space<vmem>>, vector<8x128xf32>
    tpu.vector_store %arg3[%c0_23, %c0_24], %48 {strides = array<i32>} : memref<88x128xf32, #tpu.memory_space<vmem>>, vector<8x128xf32>,
    %cst_25 = arith.constant 0xFF800000 : f32
    %50 = vector.broadcast %cst_25 : f32 to vector<8x128xf32>
    %c80 = arith.constant 80 : index
    %c0_26 = arith.constant 0 : index
    %51 = vector.load %arg3[%c80, %c0_26] : memref<88x128xf32, #tpu.memory_space<vmem>>, vector<8x128xf32>
    tpu.vector_store %arg3[%c80, %c0_26], %50 {strides = array<i32>} : memref<88x128xf32, #tpu.memory_space<vmem>>, vector<8x128xf32>,
    %cst_27 = arith.constant 0xFF800000 : f32
    %52 = vector.broadcast %cst_27 : f32 to vector<72x128xf32>
    %53 = arith.select %25, %52, %47 : vector<72x128xi1>, vector<72x128xf32>
    %c127_i32_28 = arith.constant 127 : i32
    %54 = tpu.dynamic_rotate %53 by %c127_i32_28 dim 1 : vector<72x128xf32>, i32 -> vector<72x128xf32>
    %55 = arith.maximumf %53, %54 : vector<72x128xf32>
    %c2_i32 = arith.constant 2 : i32
    %56 = tpu.dynamic_rotate %55 by %c2_i32 dim 1 : vector<72x128xf32>, i32 -> vector<72x128xf32>
    %57 = arith.maximumf %55, %56 : vector<72x128xf32>
    %c126_i32 = arith.constant 126 : i32
    %58 = tpu.dynamic_rotate %53 by %c126_i32 dim 1 : vector<72x128xf32>, i32 -> vector<72x128xf32>
    %59 = arith.maximumf %57, %58 : vector<72x128xf32>
    %c8_29 = arith.constant 8 : index
    %c0_30 = arith.constant 0 : index
    %60 = vector.load %arg3[%c8_29, %c0_30] : memref<88x128xf32, #tpu.memory_space<vmem>>, vector<72x128xf32>
    tpu.vector_store %arg3[%c8_29, %c0_30], %59 {strides = array<i32>} : memref<88x128xf32, #tpu.memory_space<vmem>>, vector<72x128xf32>,
    %c6 = arith.constant 6 : index
    %c0_31 = arith.constant 0 : index
    %61 = vector.load %arg3[%c6, %c0_31] : memref<88x128xf32, #tpu.memory_space<vmem>>, vector<72x128xf32>
    %c7_32 = arith.constant 7 : index
    %c0_33 = arith.constant 0 : index
    %62 = vector.load %arg3[%c7_32, %c0_33] : memref<88x128xf32, #tpu.memory_space<vmem>>, vector<72x128xf32>
    %63 = arith.maximumf %61, %62 : vector<72x128xf32>
    %c8_34 = arith.constant 8 : index
    %c0_35 = arith.constant 0 : index
    %64 = vector.load %arg3[%c8_34, %c0_35] : memref<88x128xf32, #tpu.memory_space<vmem>>, vector<72x128xf32>
    %65 = arith.maximumf %63, %64 : vector<72x128xf32>
    %c9_36 = arith.constant 9 : index
    %c0_37 = arith.constant 0 : index
    %66 = vector.load %arg3[%c9_36, %c0_37] : memref<88x128xf32, #tpu.memory_space<vmem>>, vector<72x128xf32>
    %67 = arith.maximumf %65, %66 : vector<72x128xf32>
    %c10 = arith.constant 10 : index
    %c0_38 = arith.constant 0 : index
    %68 = vector.load %arg3[%c10, %c0_38] : memref<88x128xf32, #tpu.memory_space<vmem>>, vector<72x128xf32>
    %69 = arith.maximumf %67, %68 : vector<72x128xf32>
    %cst_39 = arith.constant 0x7F800000 : f32
    %70 = vector.broadcast %cst_39 : f32 to vector<8x128xf32>
    %c0_40 = arith.constant 0 : index
    %c0_41 = arith.constant 0 : index
    %71 = vector.load %arg3[%c0_40, %c0_41] : memref<88x128xf32, #tpu.memory_space<vmem>>, vector<8x128xf32>
    tpu.vector_store %arg3[%c0_40, %c0_41], %70 {strides = array<i32>} : memref<88x128xf32, #tpu.memory_space<vmem>>, vector<8x128xf32>,
    %cst_42 = arith.constant 0x7F800000 : f32
    %72 = vector.broadcast %cst_42 : f32 to vector<8x128xf32>
    %c80_43 = arith.constant 80 : index
    %c0_44 = arith.constant 0 : index
    %73 = vector.load %arg3[%c80_43, %c0_44] : memref<88x128xf32, #tpu.memory_space<vmem>>, vector<8x128xf32>
    tpu.vector_store %arg3[%c80_43, %c0_44], %72 {strides = array<i32>} : memref<88x128xf32, #tpu.memory_space<vmem>>, vector<8x128xf32>,
    %cst_45 = arith.constant 0x7F800000 : f32
    %74 = vector.broadcast %cst_45 : f32 to vector<72x128xf32>
    %75 = arith.select %25, %74, %69 : vector<72x128xi1>, vector<72x128xf32>
    %c1_i32_46 = arith.constant 1 : i32
    %76 = tpu.dynamic_rotate %75 by %c1_i32_46 dim 1 : vector<72x128xf32>, i32 -> vector<72x128xf32>
    %c127_i32_47 = arith.constant 127 : i32
    %77 = tpu.dynamic_rotate %75 by %c127_i32_47 dim 1 : vector<72x128xf32>, i32 -> vector<72x128xf32>
    %78 = arith.minimumf %76, %75 : vector<72x128xf32>
    %79 = arith.minimumf %78, %77 : vector<72x128xf32>
    %c8_48 = arith.constant 8 : index
    %c0_49 = arith.constant 0 : index
    %80 = vector.load %arg3[%c8_48, %c0_49] : memref<88x128xf32, #tpu.memory_space<vmem>>, vector<72x128xf32>
    tpu.vector_store %arg3[%c8_48, %c0_49], %79 {strides = array<i32>} : memref<88x128xf32, #tpu.memory_space<vmem>>, vector<72x128xf32>,
    %c7_50 = arith.constant 7 : index
    %c0_51 = arith.constant 0 : index
    %81 = vector.load %arg3[%c7_50, %c0_51] : memref<88x128xf32, #tpu.memory_space<vmem>>, vector<72x128xf32>
    %c8_52 = arith.constant 8 : index
    %c0_53 = arith.constant 0 : index
    %82 = vector.load %arg3[%c8_52, %c0_53] : memref<88x128xf32, #tpu.memory_space<vmem>>, vector<72x128xf32>
    %83 = arith.minimumf %81, %82 : vector<72x128xf32>
    %c9_54 = arith.constant 9 : index
    %c0_55 = arith.constant 0 : index
    %84 = vector.load %arg3[%c9_54, %c0_55] : memref<88x128xf32, #tpu.memory_space<vmem>>, vector<72x128xf32>
    %85 = arith.minimumf %83, %84 : vector<72x128xf32>
    %86 = vector.extract_strided_slice %85 {offsets = [0, 0], sizes = [16, 16], strides = [1, 1]} : vector<72x128xf32> to vector<16x16xf32>
    %c0_56 = arith.constant 0 : index
    %c0_57 = arith.constant 0 : index
    %c0_58 = arith.constant 0 : index
    %87 = vector.load %arg2[%c0_56, %c0_57, %c0_58] : memref<3x16x16xf32, #tpu.memory_space<vmem>>, vector<1x16x16xf32>
    %88 = vector.shape_cast %87 : vector<1x16x16xf32> to vector<16x16xf32>
    %89 = vector.shape_cast %86 : vector<16x16xf32> to vector<1x16x16xf32>
    tpu.vector_store %arg2[%c0_56, %c0_57, %c0_58], %89 {strides = array<i32>} : memref<3x16x16xf32, #tpu.memory_space<vmem>>, vector<1x16x16xf32>,
    %90 = vector.extract_strided_slice %85 {offsets = [24, 0], sizes = [16, 16], strides = [1, 1]} : vector<72x128xf32> to vector<16x16xf32>
    %c1_59 = arith.constant 1 : index
    %c0_60 = arith.constant 0 : index
    %c0_61 = arith.constant 0 : index
    %91 = vector.load %arg2[%c1_59, %c0_60, %c0_61] : memref<3x16x16xf32, #tpu.memory_space<vmem>>, vector<1x16x16xf32>
    %92 = vector.shape_cast %91 : vector<1x16x16xf32> to vector<16x16xf32>
    %93 = vector.shape_cast %90 : vector<16x16xf32> to vector<1x16x16xf32>
    tpu.vector_store %arg2[%c1_59, %c0_60, %c0_61], %93 {strides = array<i32>} : memref<3x16x16xf32, #tpu.memory_space<vmem>>, vector<1x16x16xf32>,
    %94 = vector.extract_strided_slice %85 {offsets = [48, 0], sizes = [16, 16], strides = [1, 1]} : vector<72x128xf32> to vector<16x16xf32>
    %c2_62 = arith.constant 2 : index
    %c0_63 = arith.constant 0 : index
    %c0_64 = arith.constant 0 : index
    %95 = vector.load %arg2[%c2_62, %c0_63, %c0_64] : memref<3x16x16xf32, #tpu.memory_space<vmem>>, vector<1x16x16xf32>
    %96 = vector.shape_cast %95 : vector<1x16x16xf32> to vector<16x16xf32>
    %97 = vector.shape_cast %94 : vector<16x16xf32> to vector<1x16x16xf32>
    tpu.vector_store %arg2[%c2_62, %c0_63, %c0_64], %97 {strides = array<i32>} : memref<3x16x16xf32, #tpu.memory_space<vmem>>, vector<1x16x16xf32>,
    return
  }
  func.func @transform_0(%arg0: i32) -> (i32, i32, i32) {
    %c0_i32 = arith.constant 0 : i32
    %c0_i32_0 = arith.constant 0 : i32
    %c0_i32_1 = arith.constant 0 : i32
    return %arg0, %c0_i32, %c0_i32_0 : i32, i32, i32
  }
  func.func @transform_1(%arg0: i32) -> (i32, i32, i32) {
    %c0_i32 = arith.constant 0 : i32
    %c0_i32_0 = arith.constant 0 : i32
    %c0_i32_1 = arith.constant 0 : i32
    return %arg0, %c0_i32, %c0_i32_0 : i32, i32, i32
  }
}

</mosaic_0001>

<llo_original>
// kernel: tpu_custom_call.1
$region0: #{tpu_custom_call.1}
  #allocation0 [shape = 'u32[]', space=smem, size = 0x4, offset = 0x4, fixed_abs, tag = 'smem constant byte address 0x4 - core index']
  #allocation1 [shape = 'u32[144,128]{1,0:T(1,128)}', space=vmem, size = 0x12000, scoped, tag = 'internal scratch']
  #allocation2 [shape = 'f32[88,128]{1,0:T(8,128)}', space=vmem, size = 0xb000, scoped, tag = 'scratch operand']
  %s0 = inlined_call_operand.hbm [shape: f32[3,16,16], index: 0, kind: input, shape index: {}]
  %s1 = inlined_call_operand.hbm [shape: f32[3,16,16], index: 1, kind: output, shape index: {}]
  %s2 = sld [smem:[#allocation0]]
  $region18: #{tpu_custom_call.1} parent=0
    _
  %s4 = ssub.s32 1, %s2
  %s5 = scalar_select 0, %s4, %s2
  $region1: #{tpu_custom_call.1} parent=0
    #allocation3 [shape = 'u8[24576]{0}', space=vmem, size = 0x6000, scoped, tag = 'input window, operand 0, single buffered']
    #allocation4 [shape = 's32[1]{0}', space=sflag, size = 0x4, scoped, tag = 'scoped memory for tpu_custom_call.1']
    #allocation5 [shape = 's32[1]{0}', space=sflag, size = 0x4, scoped, tag = 'scoped memory for tpu_custom_call.1']
    #allocation6 [shape = 'u8[24576]{0}', space=vmem, size = 0x6000, scoped, tag = 'output window, operand 0, single buffered']
    %6 = vsyncpa [#allocation4], 0
    %7 = vsyncpa [#allocation5], 0
    // Predicated region
    $region2: #{tpu_custom_call.1} parent=1 // pred_check
      _
    $region3: #{tpu_custom_call.1} parent=1 // pred_check_branch
      %9 = sbr.rel (0) target = $region5
    $region4: #{tpu_custom_call.1} parent=1 // pred_region
      %s11 = ssub.s32 768, 768
      %12 = vsyncadd [#allocation4], %s11
      %s13 = sshll.u32 [#allocation3], 4
      %s14 = int_to_ptr.vmem [resolvable:$true] %s13
      %19 = dma.hbm_to_vmem [thread:$0]  %s0, 768, %s14, [#allocation4], 128, 128, 8
    $region5: #{tpu_custom_call.1} parent=1 // pred_fallthru
      _
    // Predicated region
    $region6: #{tpu_custom_call.1} parent=1 // pred_check
      _
    $region7: #{tpu_custom_call.1} parent=1 // pred_check_branch
      %21 = sbr.rel (0) target = $region9
    $region8: #{tpu_custom_call.1} parent=1 // pred_region
      %22 = dma.done [#allocation4], 768
    $region9: #{tpu_custom_call.1} parent=1 // pred_fallthru
      _
    %v23 = vlaneseq
    %v24 = vshrl.u32 %v23, 7
    %v25 = vadd.s32 %v24, 8
    %v26 = vadd.s32 %v24, 16
    %v27 = vadd.s32 %v24, 24
    %v28 = vadd.s32 %v24, 32
    %v29 = vadd.s32 %v24, 40
    %v30 = vadd.s32 %v24, 48
    %v31 = vadd.s32 %v24, 56
    %v32 = vadd.s32 %v24, 64
    %v33 = vlaneseq
    %v34 = vand.u32 %v33, 127
    %vm35 = vcmp.lt.s32.totalorder %v24, 0
    %vm36 = vcmp.lt.s32.totalorder %v25, 0
    %vm37 = vcmp.lt.s32.totalorder %v26, 0
    %vm38 = vcmp.lt.s32.totalorder %v27, 0
    %vm39 = vcmp.lt.s32.totalorder %v28, 0
    %vm40 = vcmp.lt.s32.totalorder %v29, 0
    %vm41 = vcmp.lt.s32.totalorder %v30, 0
    %vm42 = vcmp.lt.s32.totalorder %v31, 0
    %vm43 = vcmp.lt.s32.totalorder %v32, 0
    %vm44 = vcmp.ge.s32.totalorder %v24, 0
    %vm45 = vcmp.ge.s32.totalorder %v25, 0
    %vm46 = vcmp.ge.s32.totalorder %v26, 0
    %vm47 = vcmp.ge.s32.totalorder %v27, 0
    %vm48 = vcmp.ge.s32.totalorder %v28, 0
    %vm49 = vcmp.ge.s32.totalorder %v29, 0
    %vm50 = vcmp.ge.s32.totalorder %v30, 0
    %vm51 = vcmp.ge.s32.totalorder %v31, 0
    %vm52 = vcmp.ge.s32.totalorder %v32, 0
    %vm53 = vcmp.lt.s32.totalorder %v24, 16
    %vm54 = vcmp.lt.s32.totalorder %v25, 16
    %vm55 = vcmp.lt.s32.totalorder %v26, 16
    %vm56 = vcmp.lt.s32.totalorder %v27, 16
    %vm57 = vcmp.lt.s32.totalorder %v28, 16
    %vm58 = vcmp.lt.s32.totalorder %v29, 16
    %vm59 = vcmp.lt.s32.totalorder %v30, 16
    %vm60 = vcmp.lt.s32.totalorder %v31, 16
    %vm61 = vcmp.lt.s32.totalorder %v32, 16
    %vm62 = vmand %vm44, %vm53
    %vm63 = vmand %vm45, %vm54
    %vm64 = vmand %vm46, %vm55
    %vm65 = vmand %vm47, %vm56
    %vm66 = vmand %vm48, %vm57
    %vm67 = vmand %vm49, %vm58
    %vm68 = vmand %vm50, %vm59
    %vm69 = vmand %vm51, %vm60
    %vm70 = vmand %vm52, %vm61
    %vm71 = vmor %vm35, %vm62
    %vm72 = vmor %vm36, %vm63
    %vm73 = vmor %vm37, %vm64
    %vm74 = vmor %vm38, %vm65
    %vm75 = vmor %vm39, %vm66
    %vm76 = vmor %vm40, %vm67
    %vm77 = vmor %vm41, %vm68
    %vm78 = vmor %vm42, %vm69
    %vm79 = vmor %vm43, %vm70
    %vm80 = vcmp.ge.s32.totalorder %v24, 24
    %vm81 = vcmp.ge.s32.totalorder %v25, 24
    %vm82 = vcmp.ge.s32.totalorder %v26, 24
    %vm83 = vcmp.ge.s32.totalorder %v27, 24
    %vm84 = vcmp.ge.s32.totalorder %v28, 24
    %vm85 = vcmp.ge.s32.totalorder %v29, 24
    %vm86 = vcmp.ge.s32.totalorder %v30, 24
    %vm87 = vcmp.ge.s32.totalorder %v31, 24
    %vm88 = vcmp.ge.s32.totalorder %v32, 24
    %vm89 = vcmp.lt.s32.totalorder %v24, 40
    %vm90 = vcmp.lt.s32.totalorder %v25, 40
    %vm91 = vcmp.lt.s32.totalorder %v26, 40
    %vm92 = vcmp.lt.s32.totalorder %v27, 40
    %vm93 = vcmp.lt.s32.totalorder %v28, 40
    %vm94 = vcmp.lt.s32.totalorder %v29, 40
    %vm95 = vcmp.lt.s32.totalorder %v30, 40
    %vm96 = vcmp.lt.s32.totalorder %v31, 40
    %vm97 = vcmp.lt.s32.totalorder %v32, 40
    %vm98 = vmand %vm80, %vm89
    %vm99 = vmand %vm81, %vm90
    %vm100 = vmand %vm82, %vm91
    %vm101 = vmand %vm83, %vm92
    %vm102 = vmand %vm84, %vm93
    %vm103 = vmand %vm85, %vm94
    %vm104 = vmand %vm86, %vm95
    %vm105 = vmand %vm87, %vm96
    %vm106 = vmand %vm88, %vm97
    %vm107 = vmor %vm71, %vm98
    %vm108 = vmor %vm72, %vm99
    %vm109 = vmor %vm73, %vm100
    %vm110 = vmor %vm74, %vm101
    %vm111 = vmor %vm75, %vm102
    %vm112 = vmor %vm76, %vm103
    %vm113 = vmor %vm77, %vm104
    %vm114 = vmor %vm78, %vm105
    %vm115 = vmor %vm79, %vm106
    %vm116 = vcmp.ge.s32.totalorder %v24, 48
    %vm117 = vcmp.ge.s32.totalorder %v25, 48
    %vm118 = vcmp.ge.s32.totalorder %v26, 48
    %vm119 = vcmp.ge.s32.totalorder %v27, 48
    %vm120 = vcmp.ge.s32.totalorder %v28, 48
    %vm121 = vcmp.ge.s32.totalorder %v29, 48
    %vm122 = vcmp.ge.s32.totalorder %v30, 48
    %vm123 = vcmp.ge.s32.totalorder %v31, 48
    %vm124 = vcmp.ge.s32.totalorder %v32, 48
    %vm125 = vcmp.lt.s32.totalorder %v24, 64
    %vm126 = vcmp.lt.s32.totalorder %v25, 64
    %vm127 = vcmp.lt.s32.totalorder %v26, 64
    %vm128 = vcmp.lt.s32.totalorder %v27, 64
    %vm129 = vcmp.lt.s32.totalorder %v28, 64
    %vm130 = vcmp.lt.s32.totalorder %v29, 64
    %vm131 = vcmp.lt.s32.totalorder %v30, 64
    %vm132 = vcmp.lt.s32.totalorder %v31, 64
    %vm133 = vcmp.lt.s32.totalorder %v32, 64
    %vm134 = vmand %vm116, %vm125
    %vm135 = vmand %vm117, %vm126
    %vm136 = vmand %vm118, %vm127
    %vm137 = vmand %vm119, %vm128
    %vm138 = vmand %vm120, %vm129
    %vm139 = vmand %vm121, %vm130
    %vm140 = vmand %vm122, %vm131
    %vm141 = vmand %vm123, %vm132
    %vm142 = vmand %vm124, %vm133
    %vm143 = vmor %vm107, %vm134
    %vm144 = vmor %vm108, %vm135
    %vm145 = vmor %vm109, %vm136
    %vm146 = vmor %vm110, %vm137
    %vm147 = vmor %vm111, %vm138
    %vm148 = vmor %vm112, %vm139
    %vm149 = vmor %vm113, %vm140
    %vm150 = vmor %vm114, %vm141
    %vm151 = vmor %vm115, %vm142
    %vm152 = vcmp.lt.s32.totalorder %v34, 16
    %vm153 = vmand %vm143, %vm152
    %vm154 = vmand %vm144, %vm152
    %vm155 = vmand %vm145, %vm152
    %vm156 = vmand %vm146, %vm152
    %vm157 = vmand %vm147, %vm152
    %vm158 = vmand %vm148, %vm152
    %vm159 = vmand %vm149, %vm152
    %vm160 = vmand %vm150, %vm152
    %vm161 = vmand %vm151, %vm152
    %vm162 = vmxor %vm153, 1
    %vm163 = vmxor %vm154, 1
    %vm164 = vmxor %vm155, 1
    %vm165 = vmxor %vm156, 1
    %vm166 = vmxor %vm157, 1
    %vm167 = vmxor %vm158, 1
    %vm168 = vmxor %vm159, 1
    %vm169 = vmxor %vm160, 1
    %vm170 = vmxor %vm161, 1
    %171 = vst [vmem:[#allocation2] sm:$0xff] inf
    %172 = vst [vmem:[#allocation2 + $0x8] sm:$0xff] inf
    %173 = vst [vmem:[#allocation2 + $0x10] sm:$0xff] inf
    %174 = vst [vmem:[#allocation2 + $0x18] sm:$0xff] inf
    %175 = vst [vmem:[#allocation2 + $0x20] sm:$0xff] inf
    %176 = vst [vmem:[#allocation2 + $0x28] sm:$0xff] inf
    %177 = vst [vmem:[#allocation2 + $0x30] sm:$0xff] inf
    %178 = vst [vmem:[#allocation2 + $0x38] sm:$0xff] inf
    %179 = vst [vmem:[#allocation2 + $0x40] sm:$0xff] inf
    %180 = vst [vmem:[#allocation2 + $0x48] sm:$0xff] inf
    %181 = vst [vmem:[#allocation2 + $0x50] sm:$0xff] inf
    %v182 = vld [vmem:[#allocation3] sm:$0xff]
    %v183 = vld [vmem:[#allocation3 + $0x8] sm:$0xff]
    %vm184 = vcmask 130048
    %185 = vst.msk [vmem:[#allocation2 + $0x8] sm:$0xff] %vm184, %v182
    %186 = vst.msk [vmem:[#allocation2 + $0x10] sm:$0xff] %vm184, %v183
    %s187 = scalar_lea.vmem [#allocation3], 16
    %v188 = vld [vmem:[%s187] sm:$0xff]
    %v189 = vld [vmem:[%s187 + $0x8] sm:$0xff]
    %190 = vst.msk [vmem:[#allocation2 + $0x20] sm:$0xff] %vm184, %v188
    %191 = vst.msk [vmem:[#allocation2 + $0x28] sm:$0xff] %vm184, %v189
    %s192 = scalar_lea.vmem [#allocation3], 32
    %v193 = vld [vmem:[%s192] sm:$0xff]
    %v194 = vld [vmem:[%s192 + $0x8] sm:$0xff]
    %195 = vst.msk [vmem:[#allocation2 + $0x38] sm:$0xff] %vm184, %v193
    %196 = vst.msk [vmem:[#allocation2 + $0x40] sm:$0xff] %vm184, %v194
    %v197 = vld [vmem:[#allocation2 + $0x8] sm:$0xff]
    %v198 = vld [vmem:[#allocation2 + $0x10] sm:$0xff]
    %v199 = vld [vmem:[#allocation2 + $0x18] sm:$0xff]
    %v200 = vld [vmem:[#allocation2 + $0x20] sm:$0xff]
    %v201 = vld [vmem:[#allocation2 + $0x28] sm:$0xff]
    %v202 = vld [vmem:[#allocation2 + $0x30] sm:$0xff]
    %v203 = vld [vmem:[#allocation2 + $0x38] sm:$0xff]
    %v204 = vld [vmem:[#allocation2 + $0x40] sm:$0xff]
    %v205 = vld [vmem:[#allocation2 + $0x48] sm:$0xff]
    %206 = vrot.lane.b32.xlu0 %v197, 1
    %v207 = vpop.permute.xlu0 %206
    %208 = vrot.lane.b32.xlu0 %v198, 1
    %v209 = vpop.permute.xlu0 %208
    %210 = vrot.lane.b32.xlu0 %v199, 1
    %v211 = vpop.permute.xlu0 %210
    %212 = vrot.lane.b32.xlu0 %v200, 1
    %v213 = vpop.permute.xlu0 %212
    %214 = vrot.lane.b32.xlu0 %v201, 1
    %v215 = vpop.permute.xlu0 %214
    %216 = vrot.lane.b32.xlu0 %v202, 1
    %v217 = vpop.permute.xlu0 %216
    %218 = vrot.lane.b32.xlu0 %v203, 1
    %v219 = vpop.permute.xlu0 %218
    %220 = vrot.lane.b32.xlu0 %v204, 1
    %v221 = vpop.permute.xlu0 %220
    %222 = vrot.lane.b32.xlu0 %v205, 1
    %v223 = vpop.permute.xlu0 %222
    %224 = vrot.lane.b32.xlu0 %v197, 127
    %v225 = vpop.permute.xlu0 %224
    %226 = vrot.lane.b32.xlu0 %v198, 127
    %v227 = vpop.permute.xlu0 %226
    %228 = vrot.lane.b32.xlu0 %v199, 127
    %v229 = vpop.permute.xlu0 %228
    %230 = vrot.lane.b32.xlu0 %v200, 127
    %v231 = vpop.permute.xlu0 %230
    %232 = vrot.lane.b32.xlu0 %v201, 127
    %v233 = vpop.permute.xlu0 %232
    %234 = vrot.lane.b32.xlu0 %v202, 127
    %v235 = vpop.permute.xlu0 %234
    %236 = vrot.lane.b32.xlu0 %v203, 127
    %v237 = vpop.permute.xlu0 %236
    %238 = vrot.lane.b32.xlu0 %v204, 127
    %v239 = vpop.permute.xlu0 %238
    %240 = vrot.lane.b32.xlu0 %v205, 127
    %v241 = vpop.permute.xlu0 %240
    %v242 = vmin.f32 %v207, %v197
    %v243 = vmin.f32 %v209, %v198
    %v244 = vmin.f32 %v211, %v199
    %v245 = vmin.f32 %v213, %v200
    %v246 = vmin.f32 %v215, %v201
    %v247 = vmin.f32 %v217, %v202
    %v248 = vmin.f32 %v219, %v203
    %v249 = vmin.f32 %v221, %v204
    %v250 = vmin.f32 %v223, %v205
    %v251 = vmin.f32 %v242, %v225
    %v252 = vmin.f32 %v243, %v227
    %v253 = vmin.f32 %v244, %v229
    %v254 = vmin.f32 %v245, %v231
    %v255 = vmin.f32 %v246, %v233
    %v256 = vmin.f32 %v247, %v235
    %v257 = vmin.f32 %v248, %v237
    %v258 = vmin.f32 %v249, %v239
    %v259 = vmin.f32 %v250, %v241
    %260 = vst [vmem:[#allocation2 + $0x8] sm:$0xff] %v251
    %261 = vst [vmem:[#allocation2 + $0x10] sm:$0xff] %v252
    %262 = vst [vmem:[#allocation2 + $0x18] sm:$0xff] %v253
    %263 = vst [vmem:[#allocation2 + $0x20] sm:$0xff] %v254
    %264 = vst [vmem:[#allocation2 + $0x28] sm:$0xff] %v255
    %265 = vst [vmem:[#allocation2 + $0x30] sm:$0xff] %v256
    %266 = vst [vmem:[#allocation2 + $0x38] sm:$0xff] %v257
    %267 = vst [vmem:[#allocation2 + $0x40] sm:$0xff] %v258
    %268 = vst [vmem:[#allocation2 + $0x48] sm:$0xff] %v259
    %v269 = vld [vmem:[#allocation2 + $0x7] sm:$0xff]
    %v270 = vld [vmem:[#allocation2 + $0xf] sm:$0xff]
    %v271 = vld [vmem:[#allocation2 + $0x17] sm:$0xff]
    %v272 = vld [vmem:[#allocation2 + $0x1f] sm:$0xff]
    %v273 = vld [vmem:[#allocation2 + $0x27] sm:$0xff]
    %v274 = vld [vmem:[#allocation2 + $0x2f] sm:$0xff]
    %v275 = vld [vmem:[#allocation2 + $0x37] sm:$0xff]
    %v276 = vld [vmem:[#allocation2 + $0x3f] sm:$0xff]
    %v277 = vld [vmem:[#allocation2 + $0x47] sm:$0xff]
    %v278 = vld [vmem:[#allocation2 + $0x8] sm:$0xff]
    %v279 = vld [vmem:[#allocation2 + $0x10] sm:$0xff]
    %v280 = vld [vmem:[#allocation2 + $0x18] sm:$0xff]
    %v281 = vld [vmem:[#allocation2 + $0x20] sm:$0xff]
    %v282 = vld [vmem:[#allocation2 + $0x28] sm:$0xff]
    %v283 = vld [vmem:[#allocation2 + $0x30] sm:$0xff]
    %v284 = vld [vmem:[#allocation2 + $0x38] sm:$0xff]
    %v285 = vld [vmem:[#allocation2 + $0x40] sm:$0xff]
    %v286 = vld [vmem:[#allocation2 + $0x48] sm:$0xff]
    %v287 = vmin.f32 %v269, %v278
    %v288 = vmin.f32 %v270, %v279
    %v289 = vmin.f32 %v271, %v280
    %v290 = vmin.f32 %v272, %v281
    %v291 = vmin.f32 %v273, %v282
    %v292 = vmin.f32 %v274, %v283
    %v293 = vmin.f32 %v275, %v284
    %v294 = vmin.f32 %v276, %v285
    %v295 = vmin.f32 %v277, %v286
    %v296 = vld [vmem:[#allocation2 + $0x9] sm:$0xff]
    %v297 = vld [vmem:[#allocation2 + $0x11] sm:$0xff]
    %v298 = vld [vmem:[#allocation2 + $0x19] sm:$0xff]
    %v299 = vld [vmem:[#allocation2 + $0x21] sm:$0xff]
    %v300 = vld [vmem:[#allocation2 + $0x29] sm:$0xff]
    %v301 = vld [vmem:[#allocation2 + $0x31] sm:$0xff]
    %v302 = vld [vmem:[#allocation2 + $0x39] sm:$0xff]
    %v303 = vld [vmem:[#allocation2 + $0x41] sm:$0xff]
    %v304 = vld [vmem:[#allocation2 + $0x49] sm:$0xff]
    %v305 = vmin.f32 %v287, %v296
    %v306 = vmin.f32 %v288, %v297
    %v307 = vmin.f32 %v289, %v298
    %v308 = vmin.f32 %v290, %v299
    %v309 = vmin.f32 %v291, %v300
    %v310 = vmin.f32 %v292, %v301
    %v311 = vmin.f32 %v293, %v302
    %v312 = vmin.f32 %v294, %v303
    %v313 = vmin.f32 %v295, %v304
    %314 = vst [vmem:[#allocation2] sm:$0xff] -inf
    %315 = vst [vmem:[#allocation2 + $0x50] sm:$0xff] -inf
    %v316 = vsel %vm162, -inf, %v305
    %v317 = vsel %vm163, -inf, %v306
    %v318 = vsel %vm164, -inf, %v307
    %v319 = vsel %vm165, -inf, %v308
    %v320 = vsel %vm166, -inf, %v309
    %v321 = vsel %vm167, -inf, %v310
    %v322 = vsel %vm168, -inf, %v311
    %v323 = vsel %vm169, -inf, %v312
    %v324 = vsel %vm170, -inf, %v313
    %325 = vrot.lane.b32.xlu0 %v316, 127
    %v326 = vpop.permute.xlu0 %325
    %327 = vrot.lane.b32.xlu0 %v317, 127
    %v328 = vpop.permute.xlu0 %327
    %329 = vrot.lane.b32.xlu0 %v318, 127
    %v330 = vpop.permute.xlu0 %329
    %331 = vrot.lane.b32.xlu0 %v319, 127
    %v332 = vpop.permute.xlu0 %331
    %333 = vrot.lane.b32.xlu0 %v320, 127
    %v334 = vpop.permute.xlu0 %333
    %335 = vrot.lane.b32.xlu0 %v321, 127
    %v336 = vpop.permute.xlu0 %335
    %337 = vrot.lane.b32.xlu0 %v322, 127
    %v338 = vpop.permute.xlu0 %337
    %339 = vrot.lane.b32.xlu0 %v323, 127
    %v340 = vpop.permute.xlu0 %339
    %341 = vrot.lane.b32.xlu0 %v324, 127
    %v342 = vpop.permute.xlu0 %341
    %v343 = vmax.f32 %v316, %v326
    %v344 = vmax.f32 %v317, %v328
    %v345 = vmax.f32 %v318, %v330
    %v346 = vmax.f32 %v319, %v332
    %v347 = vmax.f32 %v320, %v334
    %v348 = vmax.f32 %v321, %v336
    %v349 = vmax.f32 %v322, %v338
    %v350 = vmax.f32 %v323, %v340
    %v351 = vmax.f32 %v324, %v342
    %352 = vrot.lane.b32.xlu0 %v343, 2
    %v353 = vpop.permute.xlu0 %352
    %354 = vrot.lane.b32.xlu0 %v344, 2
    %v355 = vpop.permute.xlu0 %354
    %356 = vrot.lane.b32.xlu0 %v345, 2
    %v357 = vpop.permute.xlu0 %356
    %358 = vrot.lane.b32.xlu0 %v346, 2
    %v359 = vpop.permute.xlu0 %358
    %360 = vrot.lane.b32.xlu0 %v347, 2
    %v361 = vpop.permute.xlu0 %360
    %362 = vrot.lane.b32.xlu0 %v348, 2
    %v363 = vpop.permute.xlu0 %362
    %364 = vrot.lane.b32.xlu0 %v349, 2
    %v365 = vpop.permute.xlu0 %364
    %366 = vrot.lane.b32.xlu0 %v350, 2
    %v367 = vpop.permute.xlu0 %366
    %368 = vrot.lane.b32.xlu0 %v351, 2
    %v369 = vpop.permute.xlu0 %368
    %v370 = vmax.f32 %v343, %v353
    %v371 = vmax.f32 %v344, %v355
    %v372 = vmax.f32 %v345, %v357
    %v373 = vmax.f32 %v346, %v359
    %v374 = vmax.f32 %v347, %v361
    %v375 = vmax.f32 %v348, %v363
    %v376 = vmax.f32 %v349, %v365
    %v377 = vmax.f32 %v350, %v367
    %v378 = vmax.f32 %v351, %v369
    %379 = vrot.lane.b32.xlu0 %v316, 126
    %v380 = vpop.permute.xlu0 %379
    %381 = vrot.lane.b32.xlu0 %v317, 126
    %v382 = vpop.permute.xlu0 %381
    %383 = vrot.lane.b32.xlu0 %v318, 126
    %v384 = vpop.permute.xlu0 %383
    %385 = vrot.lane.b32.xlu0 %v319, 126
    %v386 = vpop.permute.xlu0 %385
    %387 = vrot.lane.b32.xlu0 %v320, 126
    %v388 = vpop.permute.xlu0 %387
    %389 = vrot.lane.b32.xlu0 %v321, 126
    %v390 = vpop.permute.xlu0 %389
    %391 = vrot.lane.b32.xlu0 %v322, 126
    %v392 = vpop.permute.xlu0 %391
    %393 = vrot.lane.b32.xlu0 %v323, 126
    %v394 = vpop.permute.xlu0 %393
    %395 = vrot.lane.b32.xlu0 %v324, 126
    %v396 = vpop.permute.xlu0 %395
    %v397 = vmax.f32 %v370, %v380
    %v398 = vmax.f32 %v371, %v382
    %v399 = vmax.f32 %v372, %v384
    %v400 = vmax.f32 %v373, %v386
    %v401 = vmax.f32 %v374, %v388
    %v402 = vmax.f32 %v375, %v390
    %v403 = vmax.f32 %v376, %v392
    %v404 = vmax.f32 %v377, %v394
    %v405 = vmax.f32 %v378, %v396
    %406 = vst [vmem:[#allocation2 + $0x8] sm:$0xff] %v397
    %407 = vst [vmem:[#allocation2 + $0x10] sm:$0xff] %v398
    %408 = vst [vmem:[#allocation2 + $0x18] sm:$0xff] %v399
    %409 = vst [vmem:[#allocation2 + $0x20] sm:$0xff] %v400
    %410 = vst [vmem:[#allocation2 + $0x28] sm:$0xff] %v401
    %411 = vst [vmem:[#allocation2 + $0x30] sm:$0xff] %v402
    %412 = vst [vmem:[#allocation2 + $0x38] sm:$0xff] %v403
    %413 = vst [vmem:[#allocation2 + $0x40] sm:$0xff] %v404
    %414 = vst [vmem:[#allocation2 + $0x48] sm:$0xff] %v405
    %v415 = vld [vmem:[#allocation2 + $0x6] sm:$0xff]
    %v416 = vld [vmem:[#allocation2 + $0xe] sm:$0xff]
    %v417 = vld [vmem:[#allocation2 + $0x16] sm:$0xff]
    %v418 = vld [vmem:[#allocation2 + $0x1e] sm:$0xff]
    %v419 = vld [vmem:[#allocation2 + $0x26] sm:$0xff]
    %v420 = vld [vmem:[#allocation2 + $0x2e] sm:$0xff]
    %v421 = vld [vmem:[#allocation2 + $0x36] sm:$0xff]
    %v422 = vld [vmem:[#allocation2 + $0x3e] sm:$0xff]
    %v423 = vld [vmem:[#allocation2 + $0x46] sm:$0xff]
    %v424 = vld [vmem:[#allocation2 + $0x7] sm:$0xff]
    %v425 = vld [vmem:[#allocation2 + $0xf] sm:$0xff]
    %v426 = vld [vmem:[#allocation2 + $0x17] sm:$0xff]
    %v427 = vld [vmem:[#allocation2 + $0x1f] sm:$0xff]
    %v428 = vld [vmem:[#allocation2 + $0x27] sm:$0xff]
    %v429 = vld [vmem:[#allocation2 + $0x2f] sm:$0xff]
    %v430 = vld [vmem:[#allocation2 + $0x37] sm:$0xff]
    %v431 = vld [vmem:[#allocation2 + $0x3f] sm:$0xff]
    %v432 = vld [vmem:[#allocation2 + $0x47] sm:$0xff]
    %v433 = vmax.f32 %v415, %v424
    %v434 = vmax.f32 %v416, %v425
    %v435 = vmax.f32 %v417, %v426
    %v436 = vmax.f32 %v418, %v427
    %v437 = vmax.f32 %v419, %v428
    %v438 = vmax.f32 %v420, %v429
    %v439 = vmax.f32 %v421, %v430
    %v440 = vmax.f32 %v422, %v431
    %v441 = vmax.f32 %v423, %v432
    %v442 = vld [vmem:[#allocation2 + $0x8] sm:$0xff]
    %v443 = vld [vmem:[#allocation2 + $0x10] sm:$0xff]
    %v444 = vld [vmem:[#allocation2 + $0x18] sm:$0xff]
    %v445 = vld [vmem:[#allocation2 + $0x20] sm:$0xff]
    %v446 = vld [vmem:[#allocation2 + $0x28] sm:$0xff]
    %v447 = vld [vmem:[#allocation2 + $0x30] sm:$0xff]
    %v448 = vld [vmem:[#allocation2 + $0x38] sm:$0xff]
    %v449 = vld [vmem:[#allocation2 + $0x40] sm:$0xff]
    %v450 = vld [vmem:[#allocation2 + $0x48] sm:$0xff]
    %v451 = vmax.f32 %v433, %v442
    %v452 = vmax.f32 %v434, %v443
    %v453 = vmax.f32 %v435, %v444
    %v454 = vmax.f32 %v436, %v445
    %v455 = vmax.f32 %v437, %v446
    %v456 = vmax.f32 %v438, %v447
    %v457 = vmax.f32 %v439, %v448
    %v458 = vmax.f32 %v440, %v449
    %v459 = vmax.f32 %v441, %v450
    %v460 = vld [vmem:[#allocation2 + $0x9] sm:$0xff]
    %v461 = vld [vmem:[#allocation2 + $0x11] sm:$0xff]
    %v462 = vld [vmem:[#allocation2 + $0x19] sm:$0xff]
    %v463 = vld [vmem:[#allocation2 + $0x21] sm:$0xff]
    %v464 = vld [vmem:[#allocation2 + $0x29] sm:$0xff]
    %v465 = vld [vmem:[#allocation2 + $0x31] sm:$0xff]
    %v466 = vld [vmem:[#allocation2 + $0x39] sm:$0xff]
    %v467 = vld [vmem:[#allocation2 + $0x41] sm:$0xff]
    %v468 = vld [vmem:[#allocation2 + $0x49] sm:$0xff]
    %v469 = vmax.f32 %v451, %v460
    %v470 = vmax.f32 %v452, %v461
    %v471 = vmax.f32 %v453, %v462
    %v472 = vmax.f32 %v454, %v463
    %v473 = vmax.f32 %v455, %v464
    %v474 = vmax.f32 %v456, %v465
    %v475 = vmax.f32 %v457, %v466
    %v476 = vmax.f32 %v458, %v467
    %v477 = vmax.f32 %v459, %v468
    %v478 = vld [vmem:[#allocation2 + $0xa] sm:$0xff]
    %v479 = vld [vmem:[#allocation2 + $0x12] sm:$0xff]
    %v480 = vld [vmem:[#allocation2 + $0x1a] sm:$0xff]
    %v481 = vld [vmem:[#allocation2 + $0x22] sm:$0xff]
    %v482 = vld [vmem:[#allocation2 + $0x2a] sm:$0xff]
    %v483 = vld [vmem:[#allocation2 + $0x32] sm:$0xff]
    %v484 = vld [vmem:[#allocation2 + $0x3a] sm:$0xff]
    %v485 = vld [vmem:[#allocation2 + $0x42] sm:$0xff]
    %v486 = vld [vmem:[#allocation2 + $0x4a] sm:$0xff]
    %v487 = vmax.f32 %v469, %v478
    %v488 = vmax.f32 %v470, %v479
    %v489 = vmax.f32 %v471, %v480
    %v490 = vmax.f32 %v472, %v481
    %v491 = vmax.f32 %v473, %v482
    %v492 = vmax.f32 %v474, %v483
    %v493 = vmax.f32 %v475, %v484
    %v494 = vmax.f32 %v476, %v485
    %v495 = vmax.f32 %v477, %v486
    %496 = vst [vmem:[#allocation2] sm:$0xff] inf
    %497 = vst [vmem:[#allocation2 + $0x50] sm:$0xff] inf
    %v498 = vsel %vm162, inf, %v487
    %v499 = vsel %vm163, inf, %v488
    %v500 = vsel %vm164, inf, %v489
    %v501 = vsel %vm165, inf, %v490
    %v502 = vsel %vm166, inf, %v491
    %v503 = vsel %vm167, inf, %v492
    %v504 = vsel %vm168, inf, %v493
    %v505 = vsel %vm169, inf, %v494
    %v506 = vsel %vm170, inf, %v495
    %507 = vrot.lane.b32.xlu0 %v498, 1
    %v508 = vpop.permute.xlu0 %507
    %509 = vrot.lane.b32.xlu0 %v499, 1
    %v510 = vpop.permute.xlu0 %509
    %511 = vrot.lane.b32.xlu0 %v500, 1
    %v512 = vpop.permute.xlu0 %511
    %513 = vrot.lane.b32.xlu0 %v501, 1
    %v514 = vpop.permute.xlu0 %513
    %515 = vrot.lane.b32.xlu0 %v502, 1
    %v516 = vpop.permute.xlu0 %515
    %517 = vrot.lane.b32.xlu0 %v503, 1
    %v518 = vpop.permute.xlu0 %517
    %519 = vrot.lane.b32.xlu0 %v504, 1
    %v520 = vpop.permute.xlu0 %519
    %521 = vrot.lane.b32.xlu0 %v505, 1
    %v522 = vpop.permute.xlu0 %521
    %523 = vrot.lane.b32.xlu0 %v506, 1
    %v524 = vpop.permute.xlu0 %523
    %525 = vrot.lane.b32.xlu0 %v498, 127
    %v526 = vpop.permute.xlu0 %525
    %527 = vrot.lane.b32.xlu0 %v499, 127
    %v528 = vpop.permute.xlu0 %527
    %529 = vrot.lane.b32.xlu0 %v500, 127
    %v530 = vpop.permute.xlu0 %529
    %531 = vrot.lane.b32.xlu0 %v501, 127
    %v532 = vpop.permute.xlu0 %531
    %533 = vrot.lane.b32.xlu0 %v502, 127
    %v534 = vpop.permute.xlu0 %533
    %535 = vrot.lane.b32.xlu0 %v503, 127
    %v536 = vpop.permute.xlu0 %535
    %537 = vrot.lane.b32.xlu0 %v504, 127
    %v538 = vpop.permute.xlu0 %537
    %539 = vrot.lane.b32.xlu0 %v505, 127
    %v540 = vpop.permute.xlu0 %539
    %541 = vrot.lane.b32.xlu0 %v506, 127
    %v542 = vpop.permute.xlu0 %541
    %v543 = vmin.f32 %v508, %v498
    %v544 = vmin.f32 %v510, %v499
    %v545 = vmin.f32 %v512, %v500
    %v546 = vmin.f32 %v514, %v501
    %v547 = vmin.f32 %v516, %v502
    %v548 = vmin.f32 %v518, %v503
    %v549 = vmin.f32 %v520, %v504
    %v550 = vmin.f32 %v522, %v505
    %v551 = vmin.f32 %v524, %v506
    %v552 = vmin.f32 %v543, %v526
    %v553 = vmin.f32 %v544, %v528
    %v554 = vmin.f32 %v545, %v530
    %v555 = vmin.f32 %v546, %v532
    %v556 = vmin.f32 %v547, %v534
    %v557 = vmin.f32 %v548, %v536
    %v558 = vmin.f32 %v549, %v538
    %v559 = vmin.f32 %v550, %v540
    %v560 = vmin.f32 %v551, %v542
    %561 = vst [vmem:[#allocation2 + $0x8] sm:$0xff] %v552
    %562 = vst [vmem:[#allocation2 + $0x10] sm:$0xff] %v553
    %563 = vst [vmem:[#allocation2 + $0x18] sm:$0xff] %v554
    %564 = vst [vmem:[#allocation2 + $0x20] sm:$0xff] %v555
    %565 = vst [vmem:[#allocation2 + $0x28] sm:$0xff] %v556
    %566 = vst [vmem:[#allocation2 + $0x30] sm:$0xff] %v557
    %567 = vst [vmem:[#allocation2 + $0x38] sm:$0xff] %v558
    %568 = vst [vmem:[#allocation2 + $0x40] sm:$0xff] %v559
    %569 = vst [vmem:[#allocation2 + $0x48] sm:$0xff] %v560
    %v570 = vld [vmem:[#allocation2 + $0x7] sm:$0xff]
    %v571 = vld [vmem:[#allocation2 + $0xf] sm:$0xff]
    %v572 = vld [vmem:[#allocation2 + $0x1f] sm:$0xff]
    %v573 = vld [vmem:[#allocation2 + $0x27] sm:$0xff]
    %v574 = vld [vmem:[#allocation2 + $0x37] sm:$0xff]
    %v575 = vld [vmem:[#allocation2 + $0x3f] sm:$0xff]
    %v576 = vld [vmem:[#allocation2 + $0x8] sm:$0xff]
    %v577 = vld [vmem:[#allocation2 + $0x10] sm:$0xff]
    %v578 = vld [vmem:[#allocation2 + $0x20] sm:$0xff]
    %v579 = vld [vmem:[#allocation2 + $0x28] sm:$0xff]
    %v580 = vld [vmem:[#allocation2 + $0x38] sm:$0xff]
    %v581 = vld [vmem:[#allocation2 + $0x40] sm:$0xff]
    %v582 = vmin.f32 %v570, %v576
    %v583 = vmin.f32 %v571, %v577
    %v584 = vmin.f32 %v572, %v578
    %v585 = vmin.f32 %v573, %v579
    %v586 = vmin.f32 %v574, %v580
    %v587 = vmin.f32 %v575, %v581
    %v588 = vld [vmem:[#allocation2 + $0x9] sm:$0xff]
    %v589 = vld [vmem:[#allocation2 + $0x11] sm:$0xff]
    %v590 = vld [vmem:[#allocation2 + $0x21] sm:$0xff]
    %v591 = vld [vmem:[#allocation2 + $0x29] sm:$0xff]
    %v592 = vld [vmem:[#allocation2 + $0x39] sm:$0xff]
    %v593 = vld [vmem:[#allocation2 + $0x41] sm:$0xff]
    %v594 = vmin.f32 %v582, %v588
    %v595 = vmin.f32 %v583, %v589
    %v596 = vmin.f32 %v584, %v590
    %v597 = vmin.f32 %v585, %v591
    %v598 = vmin.f32 %v586, %v592
    %v599 = vmin.f32 %v587, %v593
    %600 = vst.msk [vmem:[#allocation6] sm:$0xff] %vm184, %v594
    %601 = vst.msk [vmem:[#allocation6 + $0x8] sm:$0xff] %vm184, %v595
    %s602 = scalar_lea.vmem [#allocation6], 16
    %603 = vst.msk [vmem:[%s602] sm:$0xff] %vm184, %v596
    %604 = vst.msk [vmem:[%s602 + $0x8] sm:$0xff] %vm184, %v597
    %s605 = scalar_lea.vmem [#allocation6], 32
    %606 = vst.msk [vmem:[%s605] sm:$0xff] %vm184, %v598
    %607 = vst.msk [vmem:[%s605 + $0x8] sm:$0xff] %vm184, %v599
    // Predicated region
    $region10: #{tpu_custom_call.1} parent=1 // pred_check
      _
    $region11: #{tpu_custom_call.1} parent=1 // pred_check_branch
      %609 = sbr.rel (0) target = $region13
    $region12: #{tpu_custom_call.1} parent=1 // pred_region
      %s611 = ssub.s32 768, 768
      %612 = vsyncadd [#allocation5], %s611
      %s613 = sshll.u32 [#allocation6], 4
      %s614 = int_to_ptr.vmem [resolvable:$true] %s613
      %619 = dma.vmem_to_hbm [thread:$0]  %s614, 768, %s1, [#allocation5], 128, 128, 8
    $region13: #{tpu_custom_call.1} parent=1 // pred_fallthru
      _
    // Predicated region
    $region14: #{tpu_custom_call.1} parent=1 // pred_check
      _
    $region15: #{tpu_custom_call.1} parent=1 // pred_check_branch
      %621 = sbr.rel (0) target = $region17
    $region16: #{tpu_custom_call.1} parent=1 // pred_region
      %622 = dma.done [#allocation5], 768
    $region17: #{tpu_custom_call.1} parent=1 // pred_fallthru
      _
    %623 = vsyncpa [#allocation4], 1
    %624 = vsyncpa [#allocation5], 1

</llo_original>
